<compile_context>
chip_gen: v5e
topology: v5e:2x2
jax: 0.10.0
libtpu: 0.0.40
codegen_flags: <defaults>
</compile_context>

<pallas_src>
import math

import jax
import jax.numpy as jnp
from jax.experimental import pallas as pl
from jax.experimental.pallas import tpu as pltpu

BATCH = 2
SEQ = 8          # block_size, scaled down from ModelArgs.block_size = 128
EMB = 384        # ModelArgs.embeddings_dims (= 3 * 128 lanes, lane-dense)


def _gelu_tanh(x):
    # TODO(synk): torch F.gelu defaults to the exact erf form; the tanh form
    # (== F.gelu(approximate='tanh')) is used because it lowers to the EUP
    # tanh on Mosaic.  Max abs deviation from erf-GELU < 4e-4.
    c = 0.7978845608028654  # sqrt(2/pi)
    return 0.5 * x * (1.0 + jnp.tanh(c * (x + 0.044715 * x * x * x)))


def _ffn_kernel(x_ref, w1_ref, b1_ref, w2_ref, b2_ref, o_ref):
    """Fused FFN on one (tm, E) row tile; weights (E, E) bf16, biases (1, E) f32."""
    x = x_ref[...]
    if x.dtype != jnp.bfloat16:                       # bf16 inputs skip the VPU cast
        x = x.astype(jnp.bfloat16)
    h = jnp.dot(x, w1_ref[...],
                preferred_element_type=jnp.float32) + b1_ref[...]   # MXU, f32 acc
    h = _gelu_tanh(h)                                 # f32 epilogue (v5e-safe)
    y = jnp.dot(h.astype(jnp.bfloat16), w2_ref[...],
                preferred_element_type=jnp.float32) + b2_ref[...]
    o_ref[...] = _gelu_tanh(y).astype(o_ref.dtype)    # lane-dense store (E % 128 == 0)


def _pick_row_tile(m):
    """Largest multiple-of-8 divisor of m that is <= 512; halved once if that
    would leave a single grid step, so pipelining / v7x megacore can engage."""
    tm = 8
    for cand in range(8, min(m, 512) + 1, 8):
        if m % cand == 0:
            tm = cand
    if m // tm < 2 and tm % 16 == 0:
        tm //= 2
    return tm


def _resident(shape):
    """BlockSpec for an operand whose block never changes across the grid:
    constant index_map + single buffer (no pointless double-buffering)."""
    zeros = (0,) * len(shape)
    return pl.BlockSpec(shape, lambda i: zeros, pipeline_mode=pl.Buffered(1))


def ffn_forward(params, x, *, out_dtype=None):
    B, T, E = x.shape
    M = B * T
    out_dtype = jnp.dtype(x.dtype if out_dtype is None else out_dtype)
    assert M % 8 == 0 and E % 128 == 0, "tile-alignment assumption"
    # TODO(synk): the resident (E,E) weights stop fitting VMEM around E ~ 2-4K
    # on v7x (64 MiB); an N/K-tiled variant with a pl.when accumulator (and a
    # raised vmem_limit_bytes) is required before scaling EMB.
    assert 2 * E * E * 2 <= 32 * 2**20, "resident-weight design needs N/K tiling"

    x2d = x.reshape(M, E)
    tm = _pick_row_tile(M)
    num_tiles = M // tm

    # v7x: "parallel" lets both TensorCores split row tiles, but each core then
    # DMAs its own copy of the resident weights; only worth it once the halved
    # activation traffic exceeds the duplicated weight traffic.
    weight_bytes = 2 * E * E * 2 + 2 * E * 4
    act_bytes = M * E * (x2d.dtype.itemsize + out_dtype.itemsize)
    semantics = ("parallel",) if (num_tiles >= 2 and act_bytes >= 2 * weight_bytes) \
        else ("arbitrary",)

    cost = pl.CostEstimate(
        flops=4 * M * E * E + 16 * M * E,       # two matmuls + GELU polynomials
        transcendentals=2 * M * E,               # two tanh per element
        bytes_accessed=act_bytes + weight_bytes,
    )

    out = pl.pallas_call(
        _ffn_kernel,
        grid=(num_tiles,),
        in_specs=[
            pl.BlockSpec((tm, E), lambda i: (i, 0)),   # x rows (double-buffered)
            _resident((E, E)),                         # W1^T bf16, VMEM-resident
            _resident((1, E)),                         # b1 f32
            _resident((E, E)),                         # W2^T bf16, VMEM-resident
            _resident((1, E)),                         # b2 f32
        ],
        out_specs=pl.BlockSpec((tm, E), lambda i: (i, 0)),
        out_shape=jax.ShapeDtypeStruct((M, E), out_dtype),
        compiler_params=pltpu.CompilerParams(dimension_semantics=semantics),
        cost_estimate=cost,
    )(x2d, params["w1_t"], params["b1"], params["w2_t"], params["b2"])
    return out.reshape(B, T, E)


# ------------------------------ parameters ----------------------------------

def init_params(key):
    """torch nn.Linear default init: U(-1/sqrt(in), 1/sqrt(in)) for W and b."""
    k1, k2, k3, k4 = jax.random.split(key, 4)
    bound = 1.0 / math.sqrt(EMB)
    W1 = jax.random.uniform(k1, (EMB, EMB), jnp.float32, -bound, bound)  # (out, in)
    b1 = jax.random.uniform(k2, (EMB,), jnp.float32, -bound, bound)
    W2 = jax.random.uniform(k3, (EMB, EMB), jnp.float32, -bound, bound)
    b2 = jax.random.uniform(k4, (EMB,), jnp.float32, -bound, bound)
    return {
        # exact f32 torch-layout copies (reference only)
        "W1": W1, "b1_vec": b1, "W2": W2, "b2_vec": b2,
        # kernel layouts: (in, out) bf16 weights, (1, E) f32 biases
        "w1_t": W1.T.astype(jnp.bfloat16),
        "w2_t": W2.T.astype(jnp.bfloat16),
        "b1": b1.reshape(1, EMB),
        "b2": b2.reshape(1, EMB),
    }


# ------------------------------ references ----------------------------------

def reference_exact(p, x):
    """float32, exact erf GELU — PyTorch F.gelu default semantics."""
    def gelu(v):
        return 0.5 * v * (1.0 + jax.scipy.special.erf(v / math.sqrt(2.0)))
    h = gelu(x @ p["W1"].T + p["b1_vec"])
    return gelu(h @ p["W2"].T + p["b2_vec"])


def reference_matched(p, x):
    """Same numerics as the kernel (bf16 matmul inputs, f32 accum, tanh GELU)."""
    x2d = x.reshape(-1, EMB).astype(jnp.bfloat16)
    h = jnp.dot(x2d, p["w1_t"], preferred_element_type=jnp.float32) + p["b1"]
    h = _gelu_tanh(h)
    y = jnp.dot(h.astype(jnp.bfloat16), p["w2_t"],
                preferred_element_type=jnp.float32) + p["b2"]
    return _gelu_tanh(y).reshape(x.shape)


# ---------------------------------- main -------------------------------------

if __name__ == "__main__":
    key = jax.random.PRNGKey(0)
    pkey, xkey = jax.random.split(key)
    params = init_params(pkey)
    x = jax.random.normal(xkey, (BATCH, SEQ, EMB), jnp.float32)

    # 1) f32 I/O (default): exact module dtype semantics.
    y = jax.block_until_ready(ffn_forward(params, x))
    assert y.shape == (BATCH, SEQ, EMB) and y.dtype == jnp.float32

    y_matched = reference_matched(params, x)
    err_m = float(jnp.max(jnp.abs(y - y_matched)))
    assert jnp.allclose(y, y_matched, atol=5e-3, rtol=5e-3), \
        f"mismatch vs matched reference, max err {err_m}"

    # Looser check against exact f32 / erf-GELU PyTorch semantics
    # (bf16 MXU inputs + tanh-GELU introduce ~1e-2-scale deviation).
    y_exact = reference_exact(params, x)
    err_e = float(jnp.max(jnp.abs(y - y_exact)))
    assert jnp.allclose(y, y_exact, atol=5e-2, rtol=5e-2), \
        f"mismatch vs exact f32 reference, max err {err_e}"

    # 2) bf16-I/O low-bandwidth path (what a bf16 surrounding model would use;
    #    cast here is for the demo only — real producers keep x in bf16).
    x_bf16 = x.astype(jnp.bfloat16)
    y_bf16 = jax.block_until_ready(ffn_forward(params, x_bf16))
    assert y_bf16.shape == (BATCH, SEQ, EMB) and y_bf16.dtype == jnp.bfloat16
    y_bf16_ref = reference_matched(params, x_bf16).astype(jnp.bfloat16)
    err_b = float(jnp.max(jnp.abs(y_bf16.astype(jnp.float32)
                                  - y_bf16_ref.astype(jnp.float32))))
    assert err_b < 3e-2, f"mismatch vs bf16 matched reference, max err {err_b}"

    print("KERNEL_OK")
</pallas_src>

<mosaic_0001>
module attributes {stable_mosaic.version = 11 : i64} {
  func.func @_ffn_kernel(%arg0: i32, %arg1: memref<8x384xf32, #tpu.memory_space<vmem>>, %arg2: memref<384x384xbf16, #tpu.memory_space<vmem>>, %arg3: memref<1x384xf32, #tpu.memory_space<vmem>>, %arg4: memref<384x384xbf16, #tpu.memory_space<vmem>>, %arg5: memref<1x384xf32, #tpu.memory_space<vmem>>, %arg6: memref<8x384xf32, #tpu.memory_space<vmem>>) attributes {dimension_semantics = [#tpu.dimension_semantics<arbitrary>], iteration_bounds = array<i64: 2>, scalar_prefetch = 0 : i64, scratch_operands = 0 : i64, tpu.core_type = #tpu.core_type<tc>, window_params = [{transform_indices = @transform_0, window_bounds = array<i64: 8, 384>}, {pipeline_mode = #tpu.pipeline_mode<synchronous>, transform_indices = @transform_1, window_bounds = array<i64: 384, 384>}, {pipeline_mode = #tpu.pipeline_mode<synchronous>, transform_indices = @transform_2, window_bounds = array<i64: 1, 384>}, {pipeline_mode = #tpu.pipeline_mode<synchronous>, transform_indices = @transform_3, window_bounds = array<i64: 384, 384>}, {pipeline_mode = #tpu.pipeline_mode<synchronous>, transform_indices = @transform_4, window_bounds = array<i64: 1, 384>}, {transform_indices = @transform_5, window_bounds = array<i64: 8, 384>}]} {
    %c0 = arith.constant 0 : index
    %c0_0 = arith.constant 0 : index
    %0 = vector.load %arg1[%c0, %c0_0] : memref<8x384xf32, #tpu.memory_space<vmem>>, vector<8x384xf32>
    %1 = arith.truncf %0 : vector<8x384xf32> to vector<8x384xbf16>
    %c0_1 = arith.constant 0 : index
    %c0_2 = arith.constant 0 : index
    %2 = vector.load %arg2[%c0_1, %c0_2] : memref<384x384xbf16, #tpu.memory_space<vmem>>, vector<384x384xbf16>
    %cst = arith.constant dense<0.000000e+00> : vector<8x384xf32>
    %3 = tpu.matmul %1, %2, %cst {dimension_numbers = #tpu.dot_dimension_numbers<[1], [0], [0], [1], [0, 0, 1, 1], [], []>} : vector<8x384xbf16>, vector<384x384xbf16>, vector<8x384xf32> -> vector<8x384xf32>
    %c0_3 = arith.constant 0 : index
    %c0_4 = arith.constant 0 : index
    %4 = vector.load %arg3[%c0_3, %c0_4] : memref<1x384xf32, #tpu.memory_space<vmem>>, vector<1x384xf32>
    %5 = vector.broadcast %4 : vector<1x384xf32> to vector<8x384xf32>
    %6 = arith.addf %3, %5 : vector<8x384xf32>
    %cst_5 = arith.constant 5.000000e-01 : f32
    %7 = vector.broadcast %cst_5 : f32 to vector<8x384xf32>
    %8 = arith.mulf %7, %6 : vector<8x384xf32>
    %cst_6 = arith.constant 4.471500e-02 : f32
    %9 = vector.broadcast %cst_6 : f32 to vector<8x384xf32>
    %10 = arith.mulf %9, %6 : vector<8x384xf32>
    %11 = arith.mulf %10, %6 : vector<8x384xf32>
    %12 = arith.mulf %11, %6 : vector<8x384xf32>
    %13 = arith.addf %6, %12 : vector<8x384xf32>
    %cst_7 = arith.constant 0.797884583 : f32
    %14 = vector.broadcast %cst_7 : f32 to vector<8x384xf32>
    %15 = arith.mulf %14, %13 : vector<8x384xf32>
    %16 = math.tanh %15 : vector<8x384xf32>
    %cst_8 = arith.constant 1.000000e+00 : f32
    %17 = vector.broadcast %cst_8 : f32 to vector<8x384xf32>
    %18 = arith.addf %17, %16 : vector<8x384xf32>
    %19 = arith.mulf %8, %18 : vector<8x384xf32>
    %20 = arith.truncf %19 : vector<8x384xf32> to vector<8x384xbf16>
    %c0_9 = arith.constant 0 : index
    %c0_10 = arith.constant 0 : index
    %21 = vector.load %arg4[%c0_9, %c0_10] : memref<384x384xbf16, #tpu.memory_space<vmem>>, vector<384x384xbf16>
    %cst_11 = arith.constant dense<0.000000e+00> : vector<8x384xf32>
    %22 = tpu.matmul %20, %21, %cst_11 {dimension_numbers = #tpu.dot_dimension_numbers<[1], [0], [0], [1], [0, 0, 1, 1], [], []>} : vector<8x384xbf16>, vector<384x384xbf16>, vector<8x384xf32> -> vector<8x384xf32>
    %c0_12 = arith.constant 0 : index
    %c0_13 = arith.constant 0 : index
    %23 = vector.load %arg5[%c0_12, %c0_13] : memref<1x384xf32, #tpu.memory_space<vmem>>, vector<1x384xf32>
    %24 = vector.broadcast %23 : vector<1x384xf32> to vector<8x384xf32>
    %25 = arith.addf %22, %24 : vector<8x384xf32>
    %cst_14 = arith.constant 5.000000e-01 : f32
    %26 = vector.broadcast %cst_14 : f32 to vector<8x384xf32>
    %27 = arith.mulf %26, %25 : vector<8x384xf32>
    %cst_15 = arith.constant 4.471500e-02 : f32
    %28 = vector.broadcast %cst_15 : f32 to vector<8x384xf32>
    %29 = arith.mulf %28, %25 : vector<8x384xf32>
    %30 = arith.mulf %29, %25 : vector<8x384xf32>
    %31 = arith.mulf %30, %25 : vector<8x384xf32>
    %32 = arith.addf %25, %31 : vector<8x384xf32>
    %cst_16 = arith.constant 0.797884583 : f32
    %33 = vector.broadcast %cst_16 : f32 to vector<8x384xf32>
    %34 = arith.mulf %33, %32 : vector<8x384xf32>
    %35 = math.tanh %34 : vector<8x384xf32>
    %cst_17 = arith.constant 1.000000e+00 : f32
    %36 = vector.broadcast %cst_17 : f32 to vector<8x384xf32>
    %37 = arith.addf %36, %35 : vector<8x384xf32>
    %38 = arith.mulf %27, %37 : vector<8x384xf32>
    %c0_18 = arith.constant 0 : index
    %c0_19 = arith.constant 0 : index
    %39 = vector.load %arg6[%c0_18, %c0_19] : memref<8x384xf32, #tpu.memory_space<vmem>>, vector<8x384xf32>
    tpu.vector_store %arg6[%c0_18, %c0_19], %38 {strides = array<i32>} : memref<8x384xf32, #tpu.memory_space<vmem>>, vector<8x384xf32>,
    return
  }
  func.func @transform_0(%arg0: i32) -> (i32, i32) {
    %c0_i32 = arith.constant 0 : i32
    %c0_i32_0 = arith.constant 0 : i32
    return %arg0, %c0_i32 : i32, i32
  }
  func.func @transform_1(%arg0: i32) -> (i32, i32) {
    %c0_i32 = arith.constant 0 : i32
    %c0_i32_0 = arith.constant 0 : i32
    %c0_i32_1 = arith.constant 0 : i32
    return %c0_i32, %c0_i32_0 : i32, i32
  }
  func.func @transform_2(%arg0: i32) -> (i32, i32) {
    %c0_i32 = arith.constant 0 : i32
    %c0_i32_0 = arith.constant 0 : i32
    %c0_i32_1 = arith.constant 0 : i32
    return %c0_i32, %c0_i32_0 : i32, i32
  }
  func.func @transform_3(%arg0: i32) -> (i32, i32) {
    %c0_i32 = arith.constant 0 : i32
    %c0_i32_0 = arith.constant 0 : i32
    %c0_i32_1 = arith.constant 0 : i32
    return %c0_i32, %c0_i32_0 : i32, i32
  }
  func.func @transform_4(%arg0: i32) -> (i32, i32) {
    %c0_i32 = arith.constant 0 : i32
    %c0_i32_0 = arith.constant 0 : i32
    %c0_i32_1 = arith.constant 0 : i32
    return %c0_i32, %c0_i32_0 : i32, i32
  }
  func.func @transform_5(%arg0: i32) -> (i32, i32) {
    %c0_i32 = arith.constant 0 : i32
    %c0_i32_0 = arith.constant 0 : i32
    return %arg0, %c0_i32 : i32, i32
  }
}

</mosaic_0001>

<llo_original>
// kernel: tpu_custom_call.1
$region0: #{tpu_custom_call.1}
  #allocation0 [shape = 'u32[]', space=smem, size = 0x4, offset = 0x4, fixed_abs, tag = 'smem constant byte address 0x4 - core index']
  #allocation1 [shape = 'u32[72,128]{1,0:T(1,128)}', space=vmem, size = 0x9000, scoped, tag = 'internal scratch']
  %s0 = inlined_call_operand.hbm [shape: f32[16,384], index: 0, kind: input, shape index: {}]
  %s1 = inlined_call_operand.hbm [shape: bf16[384,384], index: 1, kind: input, shape index: {}]
  %s2 = inlined_call_operand.hbm [shape: f32[1,384], index: 2, kind: input, shape index: {}]
  %s3 = inlined_call_operand.hbm [shape: bf16[384,384], index: 3, kind: input, shape index: {}]
  %s4 = inlined_call_operand.vmem [shape: f32[1,384], index: 4, kind: input, shape index: {}]
  %s5 = inlined_call_operand.hbm [shape: f32[16,384], index: 5, kind: output, shape index: {}]
  %s6 = sld [smem:[#allocation0]]
  $region69: #{tpu_custom_call.1} parent=0
    _
  %s8 = ssub.s32 1, %s6
  %s9 = scalar_select 0, %s8, %s6
  $region1: #{tpu_custom_call.1} parent=0
    #allocation2 [shape = 'u8[24576]{0}', space=vmem, size = 0x6000, scoped, tag = 'input window, operand 0']
    #allocation3 [shape = 's32[2]{0}', space=sflag, size = 0x8, scoped, tag = 'scoped memory for tpu_custom_call.1']
    #allocation4 [shape = 's32[2]{0}', space=sflag, size = 0x8, scoped, tag = 'scoped memory for tpu_custom_call.1']
    #allocation5 [shape = 'u8[294912]{0}', space=vmem, size = 0x48000, scoped, tag = 'input window, operand 1, single buffered']
    #allocation6 [shape = 's32[1]{0}', space=sflag, size = 0x4, scoped, tag = 'scoped memory for tpu_custom_call.1']
    #allocation7 [shape = 'u8[1536]{0}', space=vmem, size = 0x800, scoped, tag = 'input window, operand 2, single buffered']
    #allocation8 [shape = 'u8[294912]{0}', space=vmem, size = 0x48000, scoped, tag = 'input window, operand 3, single buffered']
    #allocation9 [shape = 's32[1]{0}', space=sflag, size = 0x4, scoped, tag = 'scoped memory for tpu_custom_call.1']
    #allocation10 [shape = 'u8[24576]{0}', space=vmem, size = 0x6000, scoped, tag = 'output window, operand 0']
    %10 = vsyncpa [#allocation3], 0
    %s11 = scalar_lea.sflag [#allocation3], 1
    %12 = vsyncpa %s11, 0
    %13 = vsyncpa [#allocation6], 0
    %14 = vsyncpa [#allocation9], 0
    %15 = vsyncpa [#allocation4], 0
    %s16 = scalar_lea.sflag [#allocation4], 1
    %17 = vsyncpa %s16, 0
    loop: start=0, step=1, limit=4
    $region2: #{tpu_custom_call.1} parent=1 // loop_pre_header
      _
    $region3: #{tpu_custom_call.1} parent=1 // loop_header
      %s19 = sphi 0, %s23
      %p20 = scmp.ge.s32.totalorder %s19, 4
      %s29 = sphi 0, %s31
      %s32 = sphi 0, %s29
      %s33 = sphi 0, %s32
      %s49 = sphi 0, %s33
      %s53 = sphi 0, %s53
      %s55 = sphi 0, %s53
      %s56 = sphi 0, %s55
      %s70 = sphi 0, %s56
      %s74 = sphi 0, %s74
      %s76 = sphi 0, %s74
      %s77 = sphi 0, %s76
      %s91 = sphi 0, %s77
      %s95 = sphi 0, %s95
      %s97 = sphi 0, %s95
      %s98 = sphi 0, %s97
      %s112 = sphi 0, %s98
      %s116 = sphi 0, %s116
      %s118 = sphi 0, %s116
      %s119 = sphi 0, %s118
      %s133 = sphi 0, %s119
      %s139 = sphi 0, %s141
      %s142 = sphi 0, %s139
      %s143 = sphi 0, %s142
      %s159 = sphi 0, %s143
    $region4: #{tpu_custom_call.1} parent=1 // loop_header_branch
      %22 = sbr.rel (%p20) target = $region8
    $region5: #{tpu_custom_call.1} parent=1 // loop_body
      %s24 = ssub.s32 %s19, 1
      %s25 = ssub.s32 %s19, 2
      %s26 = sadd.s32 %s19, 1
      %s27 = ssub.s32 %s19, %s26
      %p28 = scmp.eq.s32.totalorder %s27, 0
      %s30 = sadd.s32 %s29, 1
      %s31 = scalar_select %p28, %s29, %s30
      %p34 = pneg %p28
      %p35 = scmp.eq.s32.totalorder %s19, 1
      %p36 = por %p34, %p35
      %p37 = scmp.ne.s32.totalorder %s29, %s32
      %p38 = scmp.eq.s32.totalorder %s19, 0
      %p39 = por %p37, %p38
      %p40 = scmp.ne.s32.totalorder %s29, %s32
      %p41 = scmp.eq.s32.totalorder %s24, 1
      %p42 = por %p40, %p41
      %p43 = scmp.ne.s32.totalorder %s32, %s33
      %p44 = scmp.eq.s32.totalorder %s24, 0
      %p45 = por %p43, %p44
      %p46 = scmp.ne.s32.totalorder %s32, %s33
      %p47 = scmp.eq.s32.totalorder %s25, 1
      %p48 = por %p46, %p47
      %p50 = scmp.ne.s32.totalorder %s33, %s49
      %p51 = scmp.eq.s32.totalorder %s25, 0
      %p52 = por %p50, %p51
      %s54 = sadd.s32 %s53, 1
      %p57 = scmp.eq.s32.totalorder %s19, 1
      %p58 = scmp.ne.s32.totalorder %s53, %s55
      %p59 = scmp.eq.s32.totalorder %s19, 0
      %p60 = por %p58, %p59
      %p61 = scmp.ne.s32.totalorder %s53, %s55
      %p62 = scmp.eq.s32.totalorder %s24, 1
      %p63 = por %p61, %p62
      %p64 = scmp.ne.s32.totalorder %s55, %s56
      %p65 = scmp.eq.s32.totalorder %s24, 0
      %p66 = por %p64, %p65
      %p67 = scmp.ne.s32.totalorder %s55, %s56
      %p68 = scmp.eq.s32.totalorder %s25, 1
      %p69 = por %p67, %p68
      %p71 = scmp.ne.s32.totalorder %s56, %s70
      %p72 = scmp.eq.s32.totalorder %s25, 0
      %p73 = por %p71, %p72
      %s75 = sadd.s32 %s74, 1
      %p78 = scmp.eq.s32.totalorder %s19, 1
      %p79 = scmp.ne.s32.totalorder %s74, %s76
      %p80 = scmp.eq.s32.totalorder %s19, 0
      %p81 = por %p79, %p80
      %p82 = scmp.ne.s32.totalorder %s74, %s76
      %p83 = scmp.eq.s32.totalorder %s24, 1
      %p84 = por %p82, %p83
      %p85 = scmp.ne.s32.totalorder %s76, %s77
      %p86 = scmp.eq.s32.totalorder %s24, 0
      %p87 = por %p85, %p86
      %p88 = scmp.ne.s32.totalorder %s76, %s77
      %p89 = scmp.eq.s32.totalorder %s25, 1
      %p90 = por %p88, %p89
      %p92 = scmp.ne.s32.totalorder %s77, %s91
      %p93 = scmp.eq.s32.totalorder %s25, 0
      %p94 = por %p92, %p93
      %s96 = sadd.s32 %s95, 1
      %p99 = scmp.eq.s32.totalorder %s19, 1
      %p100 = scmp.ne.s32.totalorder %s95, %s97
      %p101 = scmp.eq.s32.totalorder %s19, 0
      %p102 = por %p100, %p101
      %p103 = scmp.ne.s32.totalorder %s95, %s97
      %p104 = scmp.eq.s32.totalorder %s24, 1
      %p105 = por %p103, %p104
      %p106 = scmp.ne.s32.totalorder %s97, %s98
      %p107 = scmp.eq.s32.totalorder %s24, 0
      %p108 = por %p106, %p107
      %p109 = scmp.ne.s32.totalorder %s97, %s98
      %p110 = scmp.eq.s32.totalorder %s25, 1
      %p111 = por %p109, %p110
      %p113 = scmp.ne.s32.totalorder %s98, %s112
      %p114 = scmp.eq.s32.totalorder %s25, 0
      %p115 = por %p113, %p114
      %s117 = sadd.s32 %s116, 1
      %p120 = scmp.eq.s32.totalorder %s19, 1
      %p121 = scmp.ne.s32.totalorder %s116, %s118
      %p122 = scmp.eq.s32.totalorder %s19, 0
      %p123 = por %p121, %p122
      %p124 = scmp.ne.s32.totalorder %s116, %s118
      %p125 = scmp.eq.s32.totalorder %s24, 1
      %p126 = por %p124, %p125
      %p127 = scmp.ne.s32.totalorder %s118, %s119
      %p128 = scmp.eq.s32.totalorder %s24, 0
      %p129 = por %p127, %p128
      %p130 = scmp.ne.s32.totalorder %s118, %s119
      %p131 = scmp.eq.s32.totalorder %s25, 1
      %p132 = por %p130, %p131
      %p134 = scmp.ne.s32.totalorder %s119, %s133
      %p135 = scmp.eq.s32.totalorder %s25, 0
      %p136 = por %p134, %p135
      %s137 = ssub.s32 %s19, %s26
      %p138 = scmp.eq.s32.totalorder %s137, 0
      %s140 = sadd.s32 %s139, 1
      %s141 = scalar_select %p138, %s139, %s140
      %p144 = pneg %p138
      %p145 = scmp.eq.s32.totalorder %s19, 1
      %p146 = por %p144, %p145
      %p147 = scmp.ne.s32.totalorder %s139, %s142
      %p148 = scmp.eq.s32.totalorder %s19, 0
      %p149 = por %p147, %p148
      %p150 = scmp.ne.s32.totalorder %s139, %s142
      %p151 = scmp.eq.s32.totalorder %s24, 1
      %p152 = por %p150, %p151
      %p153 = scmp.ne.s32.totalorder %s142, %s143
      %p154 = scmp.eq.s32.totalorder %s24, 0
      %p155 = por %p153, %p154
      %p156 = scmp.ne.s32.totalorder %s142, %s143
      %p157 = scmp.eq.s32.totalorder %s25, 1
      %p158 = por %p156, %p157
      %p160 = scmp.ne.s32.totalorder %s143, %s159
      %p161 = scmp.eq.s32.totalorder %s25, 0
      %p162 = por %p160, %p161
      %p163 = scmp.le.s32.totalorder 1, %s19
      %p164 = scmp.lt.s32.totalorder %s19, 3
      %p165 = pnand %p163, %p164
      %p166 = pneg %p165
      // Predicated region
      $region9: #{tpu_custom_call.1} parent=5 // pred_check
        _
      $region10: #{tpu_custom_call.1} parent=5 // pred_check_branch
        %168 = sbr.rel (%p165) target = $region12
      $region11: #{tpu_custom_call.1} parent=5 // pred_region
        %s169 = ssub.s32 %s19, 1
        // Predicated region
        $region13: #{tpu_custom_call.1} parent=11 // pred_check
          %p170 = pneg %p66
        $region14: #{tpu_custom_call.1} parent=11 // pred_check_branch
          %172 = sbr.rel (%p170) target = $region16
        $region15: #{tpu_custom_call.1} parent=11 // pred_region
          %174 = vsyncadd [#allocation6], 0
          %s175 = sshll.u32 %s1, 4
          %s176 = int_to_ptr.hbm [resolvable:$true] %s175
          %s177 = sshll.u32 [#allocation5], 4
          %s178 = int_to_ptr.vmem [resolvable:$true] %s177
          %183 = dma.hbm_to_vmem [thread:$0]  %s176, 9216, %s178, [#allocation6], 192, 192, 12
        $region16: #{tpu_custom_call.1} parent=11 // pred_fallthru
          _
        // Predicated region
        $region17: #{tpu_custom_call.1} parent=11 // pred_check
          %p184 = pneg %p87
        $region18: #{tpu_custom_call.1} parent=11 // pred_check_branch
          %186 = sbr.rel (%p184) target = $region20
        $region19: #{tpu_custom_call.1} parent=11 // pred_region
          %188 = vsyncadd [#allocation6], 0
          %s190 = sshll.u32 %s2, 4
          %s191 = int_to_ptr.hbm [resolvable:$true] %s190
          %s192 = sshll.u32 [#allocation7], 4
          %s193 = int_to_ptr.vmem [resolvable:$true] %s192
          %195 = dma.hbm_to_vmem [thread:$0]  %s191, 48, %s193, [#allocation6]
        $region20: #{tpu_custom_call.1} parent=11 // pred_fallthru
          _
        // Predicated region
        $region21: #{tpu_custom_call.1} parent=11 // pred_check
          %p196 = pneg %p108
        $region22: #{tpu_custom_call.1} parent=11 // pred_check_branch
          %198 = sbr.rel (%p196) target = $region24
        $region23: #{tpu_custom_call.1} parent=11 // pred_region
          %200 = vsyncadd [#allocation9], 0
          %s201 = sshll.u32 %s3, 4
          %s202 = int_to_ptr.hbm [resolvable:$true] %s201
          %s203 = sshll.u32 [#allocation8], 4
          %s204 = int_to_ptr.vmem [resolvable:$true] %s203
          %209 = dma.hbm_to_vmem [thread:$0]  %s202, 9216, %s204, [#allocation9], 192, 192, 12
        $region24: #{tpu_custom_call.1} parent=11 // pred_fallthru
          _
        // Predicated region
        $region25: #{tpu_custom_call.1} parent=11 // pred_check
          %p210 = pneg %p129
        $region26: #{tpu_custom_call.1} parent=11 // pred_check_branch
          %212 = sbr.rel (%p210) target = $region28
        $region27: #{tpu_custom_call.1} parent=11 // pred_region
          _
        $region28: #{tpu_custom_call.1} parent=11 // pred_fallthru
          _
      $region12: #{tpu_custom_call.1} parent=5 // pred_fallthru
        _
      %p213 = scmp.lt.s32.totalorder %s19, 2
      // Predicated region
      $region29: #{tpu_custom_call.1} parent=5 // pred_check
        %p214 = pneg %p213
      $region30: #{tpu_custom_call.1} parent=5 // pred_check_branch
        %216 = sbr.rel (%p214) target = $region32
      $region31: #{tpu_custom_call.1} parent=5 // pred_region
        // Predicated region
        $region33: #{tpu_custom_call.1} parent=31 // pred_check
          %p217 = pneg %p39
        $region34: #{tpu_custom_call.1} parent=31 // pred_check_branch
          %219 = sbr.rel (%p217) target = $region36
        $region35: #{tpu_custom_call.1} parent=31 // pred_region
          %s220 = sand.u32 %s29, 1
          %s221 = scalar_lea.sflag [#allocation3], %s220
          %s222 = sand.u32 %s29, 1
          %s223 = smul.addr %s222, 24
          %s224 = scalar_lea.vmem [#allocation2], %s223
          %226 = vsyncadd %s221, 0
          %s227 = smul.addr %s19, 3
          %s228 = smul.addr %s227, 8
          %s229 = scalar_lea.hbm %s0, %s228
          %s231 = sshll.u32 %s229, 4
          %s232 = int_to_ptr.hbm [resolvable:$true] %s231
          %s233 = sshll.u32 %s224, 4
          %s234 = int_to_ptr.vmem [resolvable:$true] %s233
          %236 = dma.hbm_to_vmem [thread:$0]  %s232, 384, %s234, %s221
        $region36: #{tpu_custom_call.1} parent=31 // pred_fallthru
          _
      $region32: #{tpu_custom_call.1} parent=5 // pred_fallthru
        _
      %p237 = scmp.le.s32.totalorder 1, %s19
      %p238 = scmp.lt.s32.totalorder %s19, 3
      %p239 = pnand %p237, %p238
      %p240 = pneg %p239
      // Predicated region
      $region37: #{tpu_custom_call.1} parent=5 // pred_check
        _
      $region38: #{tpu_custom_call.1} parent=5 // pred_check_branch
        %242 = sbr.rel (%p239) target = $region40
      $region39: #{tpu_custom_call.1} parent=5 // pred_region
        %s243 = ssub.s32 %s19, 1
        %s244 = sand.u32 %s32, 1
        %s245 = scalar_lea.sflag [#allocation3], %s244
        %s246 = sand.u32 %s32, 1
        %s247 = smul.addr %s246, 24
        %s248 = scalar_lea.vmem [#allocation2], %s247
        // Predicated region
        $region41: #{tpu_custom_call.1} parent=39 // pred_check
          %p249 = pneg %p45
        $region42: #{tpu_custom_call.1} parent=39 // pred_check_branch
          %251 = sbr.rel (%p249) target = $region44
        $region43: #{tpu_custom_call.1} parent=39 // pred_region
          %253 = dma.done %s245, 384
        $region44: #{tpu_custom_call.1} parent=39 // pred_fallthru
          _
        // Predicated region
        $region45: #{tpu_custom_call.1} parent=39 // pred_check
          %p254 = pneg %p66
        $region46: #{tpu_custom_call.1} parent=39 // pred_check_branch
          %256 = sbr.rel (%p254) target = $region48
        $region47: #{tpu_custom_call.1} parent=39 // pred_region
          %258 = dma.done [#allocation6], 9216
        $region48: #{tpu_custom_call.1} parent=39 // pred_fallthru
          _
        // Predicated region
        $region49: #{tpu_custom_call.1} parent=39 // pred_check
          %p259 = pneg %p87
        $region50: #{tpu_custom_call.1} parent=39 // pred_check_branch
          %261 = sbr.rel (%p259) target = $region52
        $region51: #{tpu_custom_call.1} parent=39 // pred_region
          %263 = dma.done [#allocation6], 48
        $region52: #{tpu_custom_call.1} parent=39 // pred_fallthru
          _
        // Predicated region
        $region53: #{tpu_custom_call.1} parent=39 // pred_check
          %p264 = pneg %p108
        $region54: #{tpu_custom_call.1} parent=39 // pred_check_branch
          %266 = sbr.rel (%p264) target = $region56
        $region55: #{tpu_custom_call.1} parent=39 // pred_region
          %268 = dma.done [#allocation9], 9216
        $region56: #{tpu_custom_call.1} parent=39 // pred_fallthru
          _
        %s269 = sand.u32 %s32, 1
        %s270 = scalar_lea.sflag [#allocation3], %s269
        %s271 = sand.u32 %s32, 1
        %s272 = smul.addr %s271, 24
        %s273 = scalar_lea.vmem [#allocation2], %s272
        %p274 = pneg %p45
        %p275 = pneg %p42
        %p276 = pneg %p66
        %p277 = pneg %p63
        %p278 = pneg %p87
        %p279 = pneg %p84
        %p280 = pneg %p108
        %p281 = pneg %p105
        %p282 = pneg %p129
        %p283 = pneg %p126
        %p284 = pneg %p155
        %p285 = pneg %p152
        %s286 = sand.u32 %s142, 1
        %s287 = scalar_lea.sflag [#allocation4], %s286
        %s288 = sand.u32 %s142, 1
        %s289 = smul.addr %s288, 24
        %s290 = scalar_lea.vmem [#allocation10], %s289
        %v291 = vld [vmem:[%s248] sm:$0xff]
        %v292 = vld [vmem:[%s248 + $0x8] sm:$0xff]
        %v293 = vld [vmem:[%s248 + $0x10] sm:$0xff]
        %v294 = vpack.c.bf16 %v291, %v291
        %v295 = vpack.c.bf16 %v292, %v292
        %v296 = vpack.c.bf16 %v293, %v293
        %v297 = vld [vmem:[#allocation5] sm:$0xff]
        %v298 = vld [vmem:[#allocation5 + $0x8] sm:$0xf]
        %v299 = vld [vmem:[#allocation5 + $0xc] sm:$0xff]
        %v300 = vld [vmem:[#allocation5 + $0x14] sm:$0xf]
        %v301 = vld [vmem:[#allocation5 + $0x18] sm:$0xff]
        %v302 = vld [vmem:[#allocation5 + $0x20] sm:$0xf]
        %v303 = vld [vmem:[#allocation5 + $0x24] sm:$0xff]
        %v304 = vld [vmem:[#allocation5 + $0x2c] sm:$0xf]
        %v305 = vld [vmem:[#allocation5 + $0x30] sm:$0xff]
        %v306 = vld [vmem:[#allocation5 + $0x38] sm:$0xf]
        %v307 = vld [vmem:[#allocation5 + $0x3c] sm:$0xff]
        %v308 = vld [vmem:[#allocation5 + $0x44] sm:$0xf]
        %v309 = vld [vmem:[#allocation5 + $0x48] sm:$0xff]
        %v310 = vld [vmem:[#allocation5 + $0x50] sm:$0xf]
        %v311 = vld [vmem:[#allocation5 + $0x54] sm:$0xff]
        %v312 = vld [vmem:[#allocation5 + $0x5c] sm:$0xf]
        %v313 = vld [vmem:[#allocation5 + $0x60] sm:$0xff]
        %v314 = vld [vmem:[#allocation5 + $0x68] sm:$0xf]
        %v315 = vld [vmem:[#allocation5 + $0x6c] sm:$0xff]
        %v316 = vld [vmem:[#allocation5 + $0x74] sm:$0xf]
        %v317 = vld [vmem:[#allocation5 + $0x78] sm:$0xff]
        %v318 = vld [vmem:[#allocation5 + $0x80] sm:$0xf]
        %v319 = vld [vmem:[#allocation5 + $0x84] sm:$0xff]
        %v320 = vld [vmem:[#allocation5 + $0x8c] sm:$0xf]
        %v321 = vld [vmem:[#allocation5 + $0x90] sm:$0xff]
        %v322 = vld [vmem:[#allocation5 + $0x98] sm:$0xf]
        %v323 = vld [vmem:[#allocation5 + $0x9c] sm:$0xff]
        %v324 = vld [vmem:[#allocation5 + $0xa4] sm:$0xf]
        %v325 = vld [vmem:[#allocation5 + $0xa8] sm:$0xff]
        %v326 = vld [vmem:[#allocation5 + $0xb0] sm:$0xf]
        %v327 = vld [vmem:[#allocation5 + $0xb4] sm:$0xff]
        %v328 = vld [vmem:[#allocation5 + $0xbc] sm:$0xf]
        %v329 = vld [vmem:[#allocation5 + $0xc0] sm:$0xff]
        %v330 = vld [vmem:[#allocation5 + $0xc8] sm:$0xf]
        %v331 = vld [vmem:[#allocation5 + $0xcc] sm:$0xff]
        %v332 = vld [vmem:[#allocation5 + $0xd4] sm:$0xf]
        %v333 = vld [vmem:[#allocation5 + $0xd8] sm:$0xff]
        %v334 = vld [vmem:[#allocation5 + $0xe0] sm:$0xf]
        %v335 = vld [vmem:[#allocation5 + $0xe4] sm:$0xff]
        %v336 = vld [vmem:[#allocation5 + $0xec] sm:$0xf]
        %v337 = vld [vmem:[#allocation5 + $0xf0] sm:$0xff]
        %v338 = vld [vmem:[#allocation5 + $0xf8] sm:$0xf]
        %v339 = vld [vmem:[#allocation5 + $0xfc] sm:$0xff]
        %v340 = vld [vmem:[#allocation5 + $0x104] sm:$0xf]
        %v341 = vld [vmem:[#allocation5 + $0x108] sm:$0xff]
        %v342 = vld [vmem:[#allocation5 + $0x110] sm:$0xf]
        %v343 = vld [vmem:[#allocation5 + $0x114] sm:$0xff]
        %v344 = vld [vmem:[#allocation5 + $0x11c] sm:$0xf]
        %v345 = vld [vmem:[#allocation5 + $0x120] sm:$0xff]
        %v346 = vld [vmem:[#allocation5 + $0x128] sm:$0xf]
        %v347 = vld [vmem:[#allocation5 + $0x12c] sm:$0xff]
        %v348 = vld [vmem:[#allocation5 + $0x134] sm:$0xf]
        %v349 = vld [vmem:[#allocation5 + $0x138] sm:$0xff]
        %v350 = vld [vmem:[#allocation5 + $0x140] sm:$0xf]
        %v351 = vld [vmem:[#allocation5 + $0x144] sm:$0xff]
        %v352 = vld [vmem:[#allocation5 + $0x14c] sm:$0xf]
        %v353 = vld [vmem:[#allocation5 + $0x150] sm:$0xff]
        %v354 = vld [vmem:[#allocation5 + $0x158] sm:$0xf]
        %v355 = vld [vmem:[#allocation5 + $0x15c] sm:$0xff]
        %v356 = vld [vmem:[#allocation5 + $0x164] sm:$0xf]
        %v357 = vld [vmem:[#allocation5 + $0x168] sm:$0xff]
        %v358 = vld [vmem:[#allocation5 + $0x170] sm:$0xf]
        %v359 = vld [vmem:[#allocation5 + $0x174] sm:$0xff]
        %v360 = vld [vmem:[#allocation5 + $0x17c] sm:$0xf]
        %v361 = vld [vmem:[#allocation5 + $0x180] sm:$0xff]
        %v362 = vld [vmem:[#allocation5 + $0x188] sm:$0xf]
        %v363 = vld [vmem:[#allocation5 + $0x18c] sm:$0xff]
        %v364 = vld [vmem:[#allocation5 + $0x194] sm:$0xf]
        %v365 = vld [vmem:[#allocation5 + $0x198] sm:$0xff]
        %v366 = vld [vmem:[#allocation5 + $0x1a0] sm:$0xf]
        %v367 = vld [vmem:[#allocation5 + $0x1a4] sm:$0xff]
        %v368 = vld [vmem:[#allocation5 + $0x1ac] sm:$0xf]
        %v369 = vld [vmem:[#allocation5 + $0x1b0] sm:$0xff]
        %v370 = vld [vmem:[#allocation5 + $0x1b8] sm:$0xf]
        %v371 = vld [vmem:[#allocation5 + $0x1bc] sm:$0xff]
        %v372 = vld [vmem:[#allocation5 + $0x1c4] sm:$0xf]
        %v373 = vld [vmem:[#allocation5 + $0x1c8] sm:$0xff]
        %v374 = vld [vmem:[#allocation5 + $0x1d0] sm:$0xf]
        %v375 = vld [vmem:[#allocation5 + $0x1d4] sm:$0xff]
        %v376 = vld [vmem:[#allocation5 + $0x1dc] sm:$0xf]
        %v377 = vld [vmem:[#allocation5 + $0x1e0] sm:$0xff]
        %v378 = vld [vmem:[#allocation5 + $0x1e8] sm:$0xf]
        %v379 = vld [vmem:[#allocation5 + $0x1ec] sm:$0xff]
        %v380 = vld [vmem:[#allocation5 + $0x1f4] sm:$0xf]
        %v381 = vld [vmem:[#allocation5 + $0x1f8] sm:$0xff]
        %v382 = vld [vmem:[#allocation5 + $0x200] sm:$0xf]
        %v383 = vld [vmem:[#allocation5 + $0x204] sm:$0xff]
        %v384 = vld [vmem:[#allocation5 + $0x20c] sm:$0xf]
        %v385 = vld [vmem:[#allocation5 + $0x210] sm:$0xff]
        %v386 = vld [vmem:[#allocation5 + $0x218] sm:$0xf]
        %v387 = vld [vmem:[#allocation5 + $0x21c] sm:$0xff]
        %v388 = vld [vmem:[#allocation5 + $0x224] sm:$0xf]
        %v389 = vld [vmem:[#allocation5 + $0x228] sm:$0xff]
        %v390 = vld [vmem:[#allocation5 + $0x230] sm:$0xf]
        %v391 = vld [vmem:[#allocation5 + $0x234] sm:$0xff]
        %v392 = vld [vmem:[#allocation5 + $0x23c] sm:$0xf]
        %v393 = vld [vmem:[#allocation7] sm:$0x7]
        %v395 = vperm.slane %v393, 0
        %v396 = vperm.slane %v393, 1
        %v397 = vperm.slane %v393, 2
        %v497 = vunpack.c.l.b16 %v297
        %v498 = vunpack.c.h.b16 %v297
        %v499 = vunpack.c.l.b16 %v298
        %v500 = vunpack.c.l.b16 %v299
        %v501 = vunpack.c.h.b16 %v299
        %v502 = vunpack.c.l.b16 %v300
        %v503 = vunpack.c.l.b16 %v301
        %v504 = vunpack.c.h.b16 %v301
        %v505 = vunpack.c.l.b16 %v302
        %v506 = vunpack.c.l.b16 %v303
        %v507 = vunpack.c.h.b16 %v303
        %v508 = vunpack.c.l.b16 %v304
        %v509 = vunpack.c.l.b16 %v305
        %v510 = vunpack.c.h.b16 %v305
        %v511 = vunpack.c.l.b16 %v306
        %v512 = vunpack.c.l.b16 %v307
        %v513 = vunpack.c.h.b16 %v307
        %v514 = vunpack.c.l.b16 %v308
        %v515 = vunpack.c.l.b16 %v309
        %v516 = vunpack.c.h.b16 %v309
        %v517 = vunpack.c.l.b16 %v310
        %v518 = vunpack.c.l.b16 %v311
        %v519 = vunpack.c.h.b16 %v311
        %v520 = vunpack.c.l.b16 %v312
        %v521 = vunpack.c.l.b16 %v313
        %v522 = vunpack.c.h.b16 %v313
        %v523 = vunpack.c.l.b16 %v314
        %v524 = vunpack.c.l.b16 %v315
        %v525 = vunpack.c.h.b16 %v315
        %v526 = vunpack.c.l.b16 %v316
        %v527 = vunpack.c.l.b16 %v317
        %v528 = vunpack.c.h.b16 %v317
        %v529 = vunpack.c.l.b16 %v318
        %v530 = vunpack.c.l.b16 %v319
        %v531 = vunpack.c.h.b16 %v319
        %v532 = vunpack.c.l.b16 %v320
        %v533 = vunpack.c.l.b16 %v321
        %v534 = vunpack.c.h.b16 %v321
        %v535 = vunpack.c.l.b16 %v322
        %v536 = vunpack.c.l.b16 %v323
        %v537 = vunpack.c.h.b16 %v323
        %v538 = vunpack.c.l.b16 %v324
        %v539 = vunpack.c.l.b16 %v325
        %v540 = vunpack.c.h.b16 %v325
        %v541 = vunpack.c.l.b16 %v326
        %v542 = vunpack.c.l.b16 %v327
        %v543 = vunpack.c.h.b16 %v327
        %v544 = vunpack.c.l.b16 %v328
        %v545 = vunpack.c.l.b16 %v329
        %v546 = vunpack.c.h.b16 %v329
        %v547 = vunpack.c.l.b16 %v330
        %v548 = vunpack.c.l.b16 %v331
        %v549 = vunpack.c.h.b16 %v331
        %v550 = vunpack.c.l.b16 %v332
        %v551 = vunpack.c.l.b16 %v333
        %v552 = vunpack.c.h.b16 %v333
        %v553 = vunpack.c.l.b16 %v334
        %v554 = vunpack.c.l.b16 %v335
        %v555 = vunpack.c.h.b16 %v335
        %v556 = vunpack.c.l.b16 %v336
        %v557 = vunpack.c.l.b16 %v337
        %v558 = vunpack.c.h.b16 %v337
        %v559 = vunpack.c.l.b16 %v338
        %v560 = vunpack.c.l.b16 %v339
        %v561 = vunpack.c.h.b16 %v339
        %v562 = vunpack.c.l.b16 %v340
        %v563 = vunpack.c.l.b16 %v341
        %v564 = vunpack.c.h.b16 %v341
        %v565 = vunpack.c.l.b16 %v342
        %v566 = vunpack.c.l.b16 %v343
        %v567 = vunpack.c.h.b16 %v343
        %v568 = vunpack.c.l.b16 %v344
        %v569 = vunpack.c.l.b16 %v345
        %v570 = vunpack.c.h.b16 %v345
        %v571 = vunpack.c.l.b16 %v346
        %v572 = vunpack.c.l.b16 %v347
        %v573 = vunpack.c.h.b16 %v347
        %v574 = vunpack.c.l.b16 %v348
        %v575 = vunpack.c.l.b16 %v349
        %v576 = vunpack.c.h.b16 %v349
        %v577 = vunpack.c.l.b16 %v350
        %v578 = vunpack.c.l.b16 %v351
        %v579 = vunpack.c.h.b16 %v351
        %v580 = vunpack.c.l.b16 %v352
        %v581 = vunpack.c.l.b16 %v353
        %v582 = vunpack.c.h.b16 %v353
        %v583 = vunpack.c.l.b16 %v354
        %v584 = vunpack.c.l.b16 %v355
        %v585 = vunpack.c.h.b16 %v355
        %v586 = vunpack.c.l.b16 %v356
        %v587 = vunpack.c.l.b16 %v357
        %v588 = vunpack.c.h.b16 %v357
        %v589 = vunpack.c.l.b16 %v358
        %v590 = vunpack.c.l.b16 %v359
        %v591 = vunpack.c.h.b16 %v359
        %v592 = vunpack.c.l.b16 %v360
        %v593 = vunpack.c.l.b16 %v361
        %v594 = vunpack.c.h.b16 %v361
        %v595 = vunpack.c.l.b16 %v362
        %v596 = vunpack.c.l.b16 %v363
        %v597 = vunpack.c.h.b16 %v363
        %v598 = vunpack.c.l.b16 %v364
        %v599 = vunpack.c.l.b16 %v365
        %v600 = vunpack.c.h.b16 %v365
        %v601 = vunpack.c.l.b16 %v366
        %v602 = vunpack.c.l.b16 %v367
        %v603 = vunpack.c.h.b16 %v367
        %v604 = vunpack.c.l.b16 %v368
        %v605 = vunpack.c.l.b16 %v369
        %v606 = vunpack.c.h.b16 %v369
        %v607 = vunpack.c.l.b16 %v370
        %v608 = vunpack.c.l.b16 %v371
        %v609 = vunpack.c.h.b16 %v371
        %v610 = vunpack.c.l.b16 %v372
        %v611 = vunpack.c.l.b16 %v373
        %v612 = vunpack.c.h.b16 %v373
        %v613 = vunpack.c.l.b16 %v374
        %v614 = vunpack.c.l.b16 %v375
        %v615 = vunpack.c.h.b16 %v375
        %v616 = vunpack.c.l.b16 %v376
        %v617 = vunpack.c.l.b16 %v377
        %v618 = vunpack.c.h.b16 %v377
        %v619 = vunpack.c.l.b16 %v378
        %v620 = vunpack.c.l.b16 %v379
        %v621 = vunpack.c.h.b16 %v379
        %v622 = vunpack.c.l.b16 %v380
        %v623 = vunpack.c.l.b16 %v381
        %v624 = vunpack.c.h.b16 %v381
        %v625 = vunpack.c.l.b16 %v382
        %v626 = vunpack.c.l.b16 %v383
        %v627 = vunpack.c.h.b16 %v383
        %v628 = vunpack.c.l.b16 %v384
        %v629 = vunpack.c.l.b16 %v385
        %v630 = vunpack.c.h.b16 %v385
        %v631 = vunpack.c.l.b16 %v386
        %v632 = vunpack.c.l.b16 %v387
        %v633 = vunpack.c.h.b16 %v387
        %v634 = vunpack.c.l.b16 %v388
        %v635 = vunpack.c.l.b16 %v389
        %v636 = vunpack.c.h.b16 %v389
        %v637 = vunpack.c.l.b16 %v390
        %v638 = vunpack.c.l.b16 %v391
        %v639 = vunpack.c.h.b16 %v391
        %v640 = vunpack.c.l.b16 %v392
        %v641 = vpack.c.b16 %v500, %v497
        %v642 = vpack.c.b16 %v501, %v498
        %v643 = vpack.c.b16 %v502, %v499
        %v644 = vpack.c.b16 %v506, %v503
        %v645 = vpack.c.b16 %v507, %v504
        %v646 = vpack.c.b16 %v508, %v505
        %v647 = vpack.c.b16 %v512, %v509
        %v648 = vpack.c.b16 %v513, %v510
        %v649 = vpack.c.b16 %v514, %v511
        %v650 = vpack.c.b16 %v518, %v515
        %v651 = vpack.c.b16 %v519, %v516
        %v652 = vpack.c.b16 %v520, %v517
        %v653 = vpack.c.b16 %v524, %v521
        %v654 = vpack.c.b16 %v525, %v522
        %v655 = vpack.c.b16 %v526, %v523
        %v656 = vpack.c.b16 %v530, %v527
        %v657 = vpack.c.b16 %v531, %v528
        %v658 = vpack.c.b16 %v532, %v529
        %v659 = vpack.c.b16 %v536, %v533
        %v660 = vpack.c.b16 %v537, %v534
        %v661 = vpack.c.b16 %v538, %v535
        %v662 = vpack.c.b16 %v542, %v539
        %v663 = vpack.c.b16 %v543, %v540
        %v664 = vpack.c.b16 %v544, %v541
        %v665 = vpack.c.b16 %v548, %v545
        %v666 = vpack.c.b16 %v549, %v546
        %v667 = vpack.c.b16 %v550, %v547
        %v668 = vpack.c.b16 %v554, %v551
        %v669 = vpack.c.b16 %v555, %v552
        %v670 = vpack.c.b16 %v556, %v553
        %v671 = vpack.c.b16 %v560, %v557
        %v672 = vpack.c.b16 %v561, %v558
        %v673 = vpack.c.b16 %v562, %v559
        %v674 = vpack.c.b16 %v566, %v563
        %v675 = vpack.c.b16 %v567, %v564
        %v676 = vpack.c.b16 %v568, %v565
        %v677 = vpack.c.b16 %v572, %v569
        %v678 = vpack.c.b16 %v573, %v570
        %v679 = vpack.c.b16 %v574, %v571
        %v680 = vpack.c.b16 %v578, %v575
        %v681 = vpack.c.b16 %v579, %v576
        %v682 = vpack.c.b16 %v580, %v577
        %v683 = vpack.c.b16 %v584, %v581
        %v684 = vpack.c.b16 %v585, %v582
        %v685 = vpack.c.b16 %v586, %v583
        %v686 = vpack.c.b16 %v590, %v587
        %v687 = vpack.c.b16 %v591, %v588
        %v688 = vpack.c.b16 %v592, %v589
        %v689 = vpack.c.b16 %v596, %v593
        %v690 = vpack.c.b16 %v597, %v594
        %v691 = vpack.c.b16 %v598, %v595
        %v692 = vpack.c.b16 %v602, %v599
        %v693 = vpack.c.b16 %v603, %v600
        %v694 = vpack.c.b16 %v604, %v601
        %v695 = vpack.c.b16 %v608, %v605
        %v696 = vpack.c.b16 %v609, %v606
        %v697 = vpack.c.b16 %v610, %v607
        %v698 = vpack.c.b16 %v614, %v611
        %v699 = vpack.c.b16 %v615, %v612
        %v700 = vpack.c.b16 %v616, %v613
        %v701 = vpack.c.b16 %v620, %v617
        %v702 = vpack.c.b16 %v621, %v618
        %v703 = vpack.c.b16 %v622, %v619
        %v704 = vpack.c.b16 %v626, %v623
        %v705 = vpack.c.b16 %v627, %v624
        %v706 = vpack.c.b16 %v628, %v625
        %v707 = vpack.c.b16 %v632, %v629
        %v708 = vpack.c.b16 %v633, %v630
        %v709 = vpack.c.b16 %v634, %v631
        %v710 = vpack.c.b16 %v638, %v635
        %v711 = vpack.c.b16 %v639, %v636
        %v712 = vpack.c.b16 %v640, %v637
        %785 = vmatpush.bf16.msra.mxu0 %v662
        %786 = vmatpush.bf16.msra.mxu0 %v659
        %787 = vmatpush.bf16.msra.mxu0 %v656
        %788 = vmatpush.bf16.msra.mxu0 %v653
        %789 = vmatpush.bf16.msra.mxu0 %v650
        %790 = vmatpush.bf16.msra.mxu0 %v647
        %791 = vmatpush.bf16.msra.mxu0 %v644
        %792 = vmatpush.bf16.msra.mxu0 %v641
        %793 = vmatmul.bf16.gmra.mxu0 %v294
        %v794 = vpop.f32.mrf.mxu0
        %v795 = vadd.f32 %v395, %v794
        %v796 = vpop.f32.mrf.mxu0
        %797 = vdwg.mxu0
        %798 = vmatpush.bf16.msra.mxu0 %v686
        %799 = vmatpush.bf16.msra.mxu0 %v683
        %800 = vmatpush.bf16.msra.mxu0 %v680
        %801 = vmatpush.bf16.msra.mxu0 %v677
        %802 = vmatpush.bf16.msra.mxu0 %v674
        %803 = vmatpush.bf16.msra.mxu0 %v671
        %804 = vmatpush.bf16.msra.mxu0 %v668
        %805 = vmatpush.bf16.msra.mxu0 %v665
        %806 = vmatmul.bf16.gmra.mxu0 %v295
        %v807 = vpop.f32.mrf.mxu0
        %v808 = vadd.f32 %v795, %v807
        %v809 = vpop.f32.mrf.mxu0
        %810 = vdwg.mxu0
        %811 = vmatpush.bf16.msra.mxu0 %v710
        %812 = vmatpush.bf16.msra.mxu0 %v707
        %813 = vmatpush.bf16.msra.mxu0 %v704
        %814 = vmatpush.bf16.msra.mxu0 %v701
        %815 = vmatpush.bf16.msra.mxu0 %v698
        %816 = vmatpush.bf16.msra.mxu0 %v695
        %817 = vmatpush.bf16.msra.mxu0 %v692
        %818 = vmatpush.bf16.msra.mxu0 %v689
        %819 = vmatmul.bf16.gmra.mxu0 %v296
        %v820 = vpop.f32.mrf.mxu0
        %v821 = vadd.f32 %v808, %v820
        %v822 = vpop.f32.mrf.mxu0
        %823 = vdwg.mxu0
        %824 = vmatpush.bf16.msra.mxu0 %v663
        %825 = vmatpush.bf16.msra.mxu0 %v660
        %826 = vmatpush.bf16.msra.mxu0 %v657
        %827 = vmatpush.bf16.msra.mxu0 %v654
        %828 = vmatpush.bf16.msra.mxu0 %v651
        %829 = vmatpush.bf16.msra.mxu0 %v648
        %830 = vmatpush.bf16.msra.mxu0 %v645
        %831 = vmatpush.bf16.msra.mxu0 %v642
        %832 = vmatmul.bf16.gmra.mxu0 %v294
        %v833 = vpop.f32.mrf.mxu0
        %v834 = vadd.f32 %v396, %v833
        %v835 = vpop.f32.mrf.mxu0
        %836 = vdwg.mxu0
        %837 = vmatpush.bf16.msra.mxu0 %v687
        %838 = vmatpush.bf16.msra.mxu0 %v684
        %839 = vmatpush.bf16.msra.mxu0 %v681
        %840 = vmatpush.bf16.msra.mxu0 %v678
        %841 = vmatpush.bf16.msra.mxu0 %v675
        %842 = vmatpush.bf16.msra.mxu0 %v672
        %843 = vmatpush.bf16.msra.mxu0 %v669
        %844 = vmatpush.bf16.msra.mxu0 %v666
        %845 = vmatmul.bf16.gmra.mxu0 %v295
        %v846 = vpop.f32.mrf.mxu0
        %v847 = vadd.f32 %v834, %v846
        %v848 = vpop.f32.mrf.mxu0
        %849 = vdwg.mxu0
        %850 = vmatpush.bf16.msra.mxu0 %v711
        %851 = vmatpush.bf16.msra.mxu0 %v708
        %852 = vmatpush.bf16.msra.mxu0 %v705
        %853 = vmatpush.bf16.msra.mxu0 %v702
        %854 = vmatpush.bf16.msra.mxu0 %v699
        %855 = vmatpush.bf16.msra.mxu0 %v696
        %856 = vmatpush.bf16.msra.mxu0 %v693
        %857 = vmatpush.bf16.msra.mxu0 %v690
        %858 = vmatmul.bf16.gmra.mxu0 %v296
        %v859 = vpop.f32.mrf.mxu0
        %v860 = vadd.f32 %v847, %v859
        %v861 = vpop.f32.mrf.mxu0
        %862 = vdwg.mxu0
        %863 = vmatpush.bf16.msra.mxu0 %v664
        %864 = vmatpush.bf16.msra.mxu0 %v661
        %865 = vmatpush.bf16.msra.mxu0 %v658
        %866 = vmatpush.bf16.msra.mxu0 %v655
        %867 = vmatpush.bf16.msra.mxu0 %v652
        %868 = vmatpush.bf16.msra.mxu0 %v649
        %869 = vmatpush.bf16.msra.mxu0 %v646
        %870 = vmatpush.bf16.msra.mxu0 %v643
        %871 = vmatmul.bf16.gmra.mxu0 %v294
        %v872 = vpop.f32.mrf.mxu0
        %v873 = vadd.f32 %v397, %v872
        %v874 = vpop.f32.mrf.mxu0
        %875 = vdwg.mxu0
        %876 = vmatpush.bf16.msra.mxu0 %v688
        %877 = vmatpush.bf16.msra.mxu0 %v685
        %878 = vmatpush.bf16.msra.mxu0 %v682
        %879 = vmatpush.bf16.msra.mxu0 %v679
        %880 = vmatpush.bf16.msra.mxu0 %v676
        %881 = vmatpush.bf16.msra.mxu0 %v673
        %882 = vmatpush.bf16.msra.mxu0 %v670
        %883 = vmatpush.bf16.msra.mxu0 %v667
        %884 = vmatmul.bf16.gmra.mxu0 %v295
        %v885 = vpop.f32.mrf.mxu0
        %v886 = vadd.f32 %v873, %v885
        %v887 = vpop.f32.mrf.mxu0
        %888 = vdwg.mxu0
        %889 = vmatpush.bf16.msra.mxu0 %v712
        %890 = vmatpush.bf16.msra.mxu0 %v709
        %891 = vmatpush.bf16.msra.mxu0 %v706
        %892 = vmatpush.bf16.msra.mxu0 %v703
        %893 = vmatpush.bf16.msra.mxu0 %v700
        %894 = vmatpush.bf16.msra.mxu0 %v697
        %895 = vmatpush.bf16.msra.mxu0 %v694
        %896 = vmatpush.bf16.msra.mxu0 %v691
        %897 = vmatmul.bf16.gmra.mxu0 %v296
        %v898 = vpop.f32.mrf.mxu0
        %v899 = vadd.f32 %v886, %v898
        %v900 = vpop.f32.mrf.mxu0
        %901 = vdwg.mxu0
        %v902 = vmul.f32 %v821, 0.5
        %v903 = vmul.f32 %v860, 0.5
        %v904 = vmul.f32 %v899, 0.5
        %v905 = vmul.f32 %v821, 0.044715
        %v906 = vmul.f32 %v860, 0.044715
        %v907 = vmul.f32 %v899, 0.044715
        %v908 = vmul.f32 %v905, %v821
        %v909 = vmul.f32 %v906, %v860
        %v910 = vmul.f32 %v907, %v899
        %v911 = vmul.f32 %v908, %v821
        %v912 = vmul.f32 %v909, %v860
        %v913 = vmul.f32 %v910, %v899
        %v914 = vadd.f32 %v821, %v911
        %v915 = vadd.f32 %v860, %v912
        %v916 = vadd.f32 %v899, %v913
        %v917 = vmul.f32 %v914, 0.7978846
        %v918 = vmul.f32 %v915, 0.7978846
        %v919 = vmul.f32 %v916, 0.7978846
        %v920 = vtanh.pop %v917
        %v921 = vtanh.pop %v918
        %v922 = vtanh.pop %v919
        %v923 = vadd.f32 %v920, 1.0
        %v924 = vadd.f32 %v921, 1.0
        %v925 = vadd.f32 %v922, 1.0
        %v926 = vmul.f32 %v902, %v923
        %v927 = vmul.f32 %v903, %v924
        %v928 = vmul.f32 %v904, %v925
        %v929 = vpack.c.bf16 %v926, %v926
        %v930 = vpack.c.bf16 %v927, %v927
        %v931 = vpack.c.bf16 %v928, %v928
        %v932 = vld [vmem:[#allocation8] sm:$0xff]
        %v933 = vld [vmem:[#allocation8 + $0x8] sm:$0xf]
        %v934 = vld [vmem:[#allocation8 + $0xc] sm:$0xff]
        %v935 = vld [vmem:[#allocation8 + $0x14] sm:$0xf]
        %v936 = vld [vmem:[#allocation8 + $0x18] sm:$0xff]
        %v937 = vld [vmem:[#allocation8 + $0x20] sm:$0xf]
        %v938 = vld [vmem:[#allocation8 + $0x24] sm:$0xff]
        %v939 = vld [vmem:[#allocation8 + $0x2c] sm:$0xf]
        %v940 = vld [vmem:[#allocation8 + $0x30] sm:$0xff]
        %v941 = vld [vmem:[#allocation8 + $0x38] sm:$0xf]
        %v942 = vld [vmem:[#allocation8 + $0x3c] sm:$0xff]
        %v943 = vld [vmem:[#allocation8 + $0x44] sm:$0xf]
        %v944 = vld [vmem:[#allocation8 + $0x48] sm:$0xff]
        %v945 = vld [vmem:[#allocation8 + $0x50] sm:$0xf]
        %v946 = vld [vmem:[#allocation8 + $0x54] sm:$0xff]
        %v947 = vld [vmem:[#allocation8 + $0x5c] sm:$0xf]
        %v948 = vld [vmem:[#allocation8 + $0x60] sm:$0xff]
        %v949 = vld [vmem:[#allocation8 + $0x68] sm:$0xf]
        %v950 = vld [vmem:[#allocation8 + $0x6c] sm:$0xff]
        %v951 = vld [vmem:[#allocation8 + $0x74] sm:$0xf]
        %v952 = vld [vmem:[#allocation8 + $0x78] sm:$0xff]
        %v953 = vld [vmem:[#allocation8 + $0x80] sm:$0xf]
        %v954 = vld [vmem:[#allocation8 + $0x84] sm:$0xff]
        %v955 = vld [vmem:[#allocation8 + $0x8c] sm:$0xf]
        %v956 = vld [vmem:[#allocation8 + $0x90] sm:$0xff]
        %v957 = vld [vmem:[#allocation8 + $0x98] sm:$0xf]
        %v958 = vld [vmem:[#allocation8 + $0x9c] sm:$0xff]
        %v959 = vld [vmem:[#allocation8 + $0xa4] sm:$0xf]
        %v960 = vld [vmem:[#allocation8 + $0xa8] sm:$0xff]
        %v961 = vld [vmem:[#allocation8 + $0xb0] sm:$0xf]
        %v962 = vld [vmem:[#allocation8 + $0xb4] sm:$0xff]
        %v963 = vld [vmem:[#allocation8 + $0xbc] sm:$0xf]
        %v964 = vld [vmem:[#allocation8 + $0xc0] sm:$0xff]
        %v965 = vld [vmem:[#allocation8 + $0xc8] sm:$0xf]
        %v966 = vld [vmem:[#allocation8 + $0xcc] sm:$0xff]
        %v967 = vld [vmem:[#allocation8 + $0xd4] sm:$0xf]
        %v968 = vld [vmem:[#allocation8 + $0xd8] sm:$0xff]
        %v969 = vld [vmem:[#allocation8 + $0xe0] sm:$0xf]
        %v970 = vld [vmem:[#allocation8 + $0xe4] sm:$0xff]
        %v971 = vld [vmem:[#allocation8 + $0xec] sm:$0xf]
        %v972 = vld [vmem:[#allocation8 + $0xf0] sm:$0xff]
        %v973 = vld [vmem:[#allocation8 + $0xf8] sm:$0xf]
        %v974 = vld [vmem:[#allocation8 + $0xfc] sm:$0xff]
        %v975 = vld [vmem:[#allocation8 + $0x104] sm:$0xf]
        %v976 = vld [vmem:[#allocation8 + $0x108] sm:$0xff]
        %v977 = vld [vmem:[#allocation8 + $0x110] sm:$0xf]
        %v978 = vld [vmem:[#allocation8 + $0x114] sm:$0xff]
        %v979 = vld [vmem:[#allocation8 + $0x11c] sm:$0xf]
        %v980 = vld [vmem:[#allocation8 + $0x120] sm:$0xff]
        %v981 = vld [vmem:[#allocation8 + $0x128] sm:$0xf]
        %v982 = vld [vmem:[#allocation8 + $0x12c] sm:$0xff]
        %v983 = vld [vmem:[#allocation8 + $0x134] sm:$0xf]
        %v984 = vld [vmem:[#allocation8 + $0x138] sm:$0xff]
        %v985 = vld [vmem:[#allocation8 + $0x140] sm:$0xf]
        %v986 = vld [vmem:[#allocation8 + $0x144] sm:$0xff]
        %v987 = vld [vmem:[#allocation8 + $0x14c] sm:$0xf]
        %v988 = vld [vmem:[#allocation8 + $0x150] sm:$0xff]
        %v989 = vld [vmem:[#allocation8 + $0x158] sm:$0xf]
        %v990 = vld [vmem:[#allocation8 + $0x15c] sm:$0xff]
        %v991 = vld [vmem:[#allocation8 + $0x164] sm:$0xf]
        %v992 = vld [vmem:[#allocation8 + $0x168] sm:$0xff]
        %v993 = vld [vmem:[#allocation8 + $0x170] sm:$0xf]
        %v994 = vld [vmem:[#allocation8 + $0x174] sm:$0xff]
        %v995 = vld [vmem:[#allocation8 + $0x17c] sm:$0xf]
        %v996 = vld [vmem:[#allocation8 + $0x180] sm:$0xff]
        %v997 = vld [vmem:[#allocation8 + $0x188] sm:$0xf]
        %v998 = vld [vmem:[#allocation8 + $0x18c] sm:$0xff]
        %v999 = vld [vmem:[#allocation8 + $0x194] sm:$0xf]
        %v1000 = vld [vmem:[#allocation8 + $0x198] sm:$0xff]
        %v1001 = vld [vmem:[#allocation8 + $0x1a0] sm:$0xf]
        %v1002 = vld [vmem:[#allocation8 + $0x1a4] sm:$0xff]
        %v1003 = vld [vmem:[#allocation8 + $0x1ac] sm:$0xf]
        %v1004 = vld [vmem:[#allocation8 + $0x1b0] sm:$0xff]
        %v1005 = vld [vmem:[#allocation8 + $0x1b8] sm:$0xf]
        %v1006 = vld [vmem:[#allocation8 + $0x1bc] sm:$0xff]
        %v1007 = vld [vmem:[#allocation8 + $0x1c4] sm:$0xf]
        %v1008 = vld [vmem:[#allocation8 + $0x1c8] sm:$0xff]
        %v1009 = vld [vmem:[#allocation8 + $0x1d0] sm:$0xf]
        %v1010 = vld [vmem:[#allocation8 + $0x1d4] sm:$0xff]
        %v1011 = vld [vmem:[#allocation8 + $0x1dc] sm:$0xf]
        %v1012 = vld [vmem:[#allocation8 + $0x1e0] sm:$0xff]
        %v1013 = vld [vmem:[#allocation8 + $0x1e8] sm:$0xf]
        %v1014 = vld [vmem:[#allocation8 + $0x1ec] sm:$0xff]
        %v1015 = vld [vmem:[#allocation8 + $0x1f4] sm:$0xf]
        %v1016 = vld [vmem:[#allocation8 + $0x1f8] sm:$0xff]
        %v1017 = vld [vmem:[#allocation8 + $0x200] sm:$0xf]
        %v1018 = vld [vmem:[#allocation8 + $0x204] sm:$0xff]
        %v1019 = vld [vmem:[#allocation8 + $0x20c] sm:$0xf]
        %v1020 = vld [vmem:[#allocation8 + $0x210] sm:$0xff]
        %v1021 = vld [vmem:[#allocation8 + $0x218] sm:$0xf]
        %v1022 = vld [vmem:[#allocation8 + $0x21c] sm:$0xff]
        %v1023 = vld [vmem:[#allocation8 + $0x224] sm:$0xf]
        %v1024 = vld [vmem:[#allocation8 + $0x228] sm:$0xff]
        %v1025 = vld [vmem:[#allocation8 + $0x230] sm:$0xf]
        %v1026 = vld [vmem:[#allocation8 + $0x234] sm:$0xff]
        %v1027 = vld [vmem:[#allocation8 + $0x23c] sm:$0xf]
        %v1028 = vld [vmem:[%s4] sm:$0x7]
        %v1030 = vperm.slane %v1028, 0
        %v1031 = vperm.slane %v1028, 1
        %v1032 = vperm.slane %v1028, 2
        %v1132 = vunpack.c.l.b16 %v932
        %v1133 = vunpack.c.h.b16 %v932
        %v1134 = vunpack.c.l.b16 %v933
        %v1135 = vunpack.c.l.b16 %v934
        %v1136 = vunpack.c.h.b16 %v934
        %v1137 = vunpack.c.l.b16 %v935
        %v1138 = vunpack.c.l.b16 %v936
        %v1139 = vunpack.c.h.b16 %v936
        %v1140 = vunpack.c.l.b16 %v937
        %v1141 = vunpack.c.l.b16 %v938
        %v1142 = vunpack.c.h.b16 %v938
        %v1143 = vunpack.c.l.b16 %v939
        %v1144 = vunpack.c.l.b16 %v940
        %v1145 = vunpack.c.h.b16 %v940
        %v1146 = vunpack.c.l.b16 %v941
        %v1147 = vunpack.c.l.b16 %v942
        %v1148 = vunpack.c.h.b16 %v942
        %v1149 = vunpack.c.l.b16 %v943
        %v1150 = vunpack.c.l.b16 %v944
        %v1151 = vunpack.c.h.b16 %v944
        %v1152 = vunpack.c.l.b16 %v945
        %v1153 = vunpack.c.l.b16 %v946
        %v1154 = vunpack.c.h.b16 %v946
        %v1155 = vunpack.c.l.b16 %v947
        %v1156 = vunpack.c.l.b16 %v948
        %v1157 = vunpack.c.h.b16 %v948
        %v1158 = vunpack.c.l.b16 %v949
        %v1159 = vunpack.c.l.b16 %v950
        %v1160 = vunpack.c.h.b16 %v950
        %v1161 = vunpack.c.l.b16 %v951
        %v1162 = vunpack.c.l.b16 %v952
        %v1163 = vunpack.c.h.b16 %v952
        %v1164 = vunpack.c.l.b16 %v953
        %v1165 = vunpack.c.l.b16 %v954
        %v1166 = vunpack.c.h.b16 %v954
        %v1167 = vunpack.c.l.b16 %v955
        %v1168 = vunpack.c.l.b16 %v956
        %v1169 = vunpack.c.h.b16 %v956
        %v1170 = vunpack.c.l.b16 %v957
        %v1171 = vunpack.c.l.b16 %v958
        %v1172 = vunpack.c.h.b16 %v958
        %v1173 = vunpack.c.l.b16 %v959
        %v1174 = vunpack.c.l.b16 %v960
        %v1175 = vunpack.c.h.b16 %v960
        %v1176 = vunpack.c.l.b16 %v961
        %v1177 = vunpack.c.l.b16 %v962
        %v1178 = vunpack.c.h.b16 %v962
        %v1179 = vunpack.c.l.b16 %v963
        %v1180 = vunpack.c.l.b16 %v964
        %v1181 = vunpack.c.h.b16 %v964
        %v1182 = vunpack.c.l.b16 %v965
        %v1183 = vunpack.c.l.b16 %v966
        %v1184 = vunpack.c.h.b16 %v966
        %v1185 = vunpack.c.l.b16 %v967
        %v1186 = vunpack.c.l.b16 %v968
        %v1187 = vunpack.c.h.b16 %v968
        %v1188 = vunpack.c.l.b16 %v969
        %v1189 = vunpack.c.l.b16 %v970
        %v1190 = vunpack.c.h.b16 %v970
        %v1191 = vunpack.c.l.b16 %v971
        %v1192 = vunpack.c.l.b16 %v972
        %v1193 = vunpack.c.h.b16 %v972
        %v1194 = vunpack.c.l.b16 %v973
        %v1195 = vunpack.c.l.b16 %v974
        %v1196 = vunpack.c.h.b16 %v974
        %v1197 = vunpack.c.l.b16 %v975
        %v1198 = vunpack.c.l.b16 %v976
        %v1199 = vunpack.c.h.b16 %v976
        %v1200 = vunpack.c.l.b16 %v977
        %v1201 = vunpack.c.l.b16 %v978
        %v1202 = vunpack.c.h.b16 %v978
        %v1203 = vunpack.c.l.b16 %v979
        %v1204 = vunpack.c.l.b16 %v980
        %v1205 = vunpack.c.h.b16 %v980
        %v1206 = vunpack.c.l.b16 %v981
        %v1207 = vunpack.c.l.b16 %v982
        %v1208 = vunpack.c.h.b16 %v982
        %v1209 = vunpack.c.l.b16 %v983
        %v1210 = vunpack.c.l.b16 %v984
        %v1211 = vunpack.c.h.b16 %v984
        %v1212 = vunpack.c.l.b16 %v985
        %v1213 = vunpack.c.l.b16 %v986
        %v1214 = vunpack.c.h.b16 %v986
        %v1215 = vunpack.c.l.b16 %v987
        %v1216 = vunpack.c.l.b16 %v988
        %v1217 = vunpack.c.h.b16 %v988
        %v1218 = vunpack.c.l.b16 %v989
        %v1219 = vunpack.c.l.b16 %v990
        %v1220 = vunpack.c.h.b16 %v990
        %v1221 = vunpack.c.l.b16 %v991
        %v1222 = vunpack.c.l.b16 %v992
        %v1223 = vunpack.c.h.b16 %v992
        %v1224 = vunpack.c.l.b16 %v993
        %v1225 = vunpack.c.l.b16 %v994
        %v1226 = vunpack.c.h.b16 %v994
        %v1227 = vunpack.c.l.b16 %v995
        %v1228 = vunpack.c.l.b16 %v996
        %v1229 = vunpack.c.h.b16 %v996
        %v1230 = vunpack.c.l.b16 %v997
        %v1231 = vunpack.c.l.b16 %v998
        %v1232 = vunpack.c.h.b16 %v998
        %v1233 = vunpack.c.l.b16 %v999
        %v1234 = vunpack.c.l.b16 %v1000
        %v1235 = vunpack.c.h.b16 %v1000
        %v1236 = vunpack.c.l.b16 %v1001
        %v1237 = vunpack.c.l.b16 %v1002
        %v1238 = vunpack.c.h.b16 %v1002
        %v1239 = vunpack.c.l.b16 %v1003
        %v1240 = vunpack.c.l.b16 %v1004
        %v1241 = vunpack.c.h.b16 %v1004
        %v1242 = vunpack.c.l.b16 %v1005
        %v1243 = vunpack.c.l.b16 %v1006
        %v1244 = vunpack.c.h.b16 %v1006
        %v1245 = vunpack.c.l.b16 %v1007
        %v1246 = vunpack.c.l.b16 %v1008
        %v1247 = vunpack.c.h.b16 %v1008
        %v1248 = vunpack.c.l.b16 %v1009
        %v1249 = vunpack.c.l.b16 %v1010
        %v1250 = vunpack.c.h.b16 %v1010
        %v1251 = vunpack.c.l.b16 %v1011
        %v1252 = vunpack.c.l.b16 %v1012
        %v1253 = vunpack.c.h.b16 %v1012
        %v1254 = vunpack.c.l.b16 %v1013
        %v1255 = vunpack.c.l.b16 %v1014
        %v1256 = vunpack.c.h.b16 %v1014
        %v1257 = vunpack.c.l.b16 %v1015
        %v1258 = vunpack.c.l.b16 %v1016
        %v1259 = vunpack.c.h.b16 %v1016
        %v1260 = vunpack.c.l.b16 %v1017
        %v1261 = vunpack.c.l.b16 %v1018
        %v1262 = vunpack.c.h.b16 %v1018
        %v1263 = vunpack.c.l.b16 %v1019
        %v1264 = vunpack.c.l.b16 %v1020
        %v1265 = vunpack.c.h.b16 %v1020
        %v1266 = vunpack.c.l.b16 %v1021
        %v1267 = vunpack.c.l.b16 %v1022
        %v1268 = vunpack.c.h.b16 %v1022
        %v1269 = vunpack.c.l.b16 %v1023
        %v1270 = vunpack.c.l.b16 %v1024
        %v1271 = vunpack.c.h.b16 %v1024
        %v1272 = vunpack.c.l.b16 %v1025
        %v1273 = vunpack.c.l.b16 %v1026
        %v1274 = vunpack.c.h.b16 %v1026
        %v1275 = vunpack.c.l.b16 %v1027
        %v1276 = vpack.c.b16 %v1135, %v1132
        %v1277 = vpack.c.b16 %v1136, %v1133
        %v1278 = vpack.c.b16 %v1137, %v1134
        %v1279 = vpack.c.b16 %v1141, %v1138
        %v1280 = vpack.c.b16 %v1142, %v1139
        %v1281 = vpack.c.b16 %v1143, %v1140
        %v1282 = vpack.c.b16 %v1147, %v1144
        %v1283 = vpack.c.b16 %v1148, %v1145
        %v1284 = vpack.c.b16 %v1149, %v1146
        %v1285 = vpack.c.b16 %v1153, %v1150
        %v1286 = vpack.c.b16 %v1154, %v1151
        %v1287 = vpack.c.b16 %v1155, %v1152
        %v1288 = vpack.c.b16 %v1159, %v1156
        %v1289 = vpack.c.b16 %v1160, %v1157
        %v1290 = vpack.c.b16 %v1161, %v1158
        %v1291 = vpack.c.b16 %v1165, %v1162
        %v1292 = vpack.c.b16 %v1166, %v1163
        %v1293 = vpack.c.b16 %v1167, %v1164
        %v1294 = vpack.c.b16 %v1171, %v1168
        %v1295 = vpack.c.b16 %v1172, %v1169
        %v1296 = vpack.c.b16 %v1173, %v1170
        %v1297 = vpack.c.b16 %v1177, %v1174
        %v1298 = vpack.c.b16 %v1178, %v1175
        %v1299 = vpack.c.b16 %v1179, %v1176
        %v1300 = vpack.c.b16 %v1183, %v1180
        %v1301 = vpack.c.b16 %v1184, %v1181
        %v1302 = vpack.c.b16 %v1185, %v1182
        %v1303 = vpack.c.b16 %v1189, %v1186
        %v1304 = vpack.c.b16 %v1190, %v1187
        %v1305 = vpack.c.b16 %v1191, %v1188
        %v1306 = vpack.c.b16 %v1195, %v1192
        %v1307 = vpack.c.b16 %v1196, %v1193
        %v1308 = vpack.c.b16 %v1197, %v1194
        %v1309 = vpack.c.b16 %v1201, %v1198
        %v1310 = vpack.c.b16 %v1202, %v1199
        %v1311 = vpack.c.b16 %v1203, %v1200
        %v1312 = vpack.c.b16 %v1207, %v1204
        %v1313 = vpack.c.b16 %v1208, %v1205
        %v1314 = vpack.c.b16 %v1209, %v1206
        %v1315 = vpack.c.b16 %v1213, %v1210
        %v1316 = vpack.c.b16 %v1214, %v1211
        %v1317 = vpack.c.b16 %v1215, %v1212
        %v1318 = vpack.c.b16 %v1219, %v1216
        %v1319 = vpack.c.b16 %v1220, %v1217
        %v1320 = vpack.c.b16 %v1221, %v1218
        %v1321 = vpack.c.b16 %v1225, %v1222
        %v1322 = vpack.c.b16 %v1226, %v1223
        %v1323 = vpack.c.b16 %v1227, %v1224
        %v1324 = vpack.c.b16 %v1231, %v1228
        %v1325 = vpack.c.b16 %v1232, %v1229
        %v1326 = vpack.c.b16 %v1233, %v1230
        %v1327 = vpack.c.b16 %v1237, %v1234
        %v1328 = vpack.c.b16 %v1238, %v1235
        %v1329 = vpack.c.b16 %v1239, %v1236
        %v1330 = vpack.c.b16 %v1243, %v1240
        %v1331 = vpack.c.b16 %v1244, %v1241
        %v1332 = vpack.c.b16 %v1245, %v1242
        %v1333 = vpack.c.b16 %v1249, %v1246
        %v1334 = vpack.c.b16 %v1250, %v1247
        %v1335 = vpack.c.b16 %v1251, %v1248
        %v1336 = vpack.c.b16 %v1255, %v1252
        %v1337 = vpack.c.b16 %v1256, %v1253
        %v1338 = vpack.c.b16 %v1257, %v1254
        %v1339 = vpack.c.b16 %v1261, %v1258
        %v1340 = vpack.c.b16 %v1262, %v1259
        %v1341 = vpack.c.b16 %v1263, %v1260
        %v1342 = vpack.c.b16 %v1267, %v1264
        %v1343 = vpack.c.b16 %v1268, %v1265
        %v1344 = vpack.c.b16 %v1269, %v1266
        %v1345 = vpack.c.b16 %v1273, %v1270
        %v1346 = vpack.c.b16 %v1274, %v1271
        %v1347 = vpack.c.b16 %v1275, %v1272
        %1420 = vmatpush.bf16.msra.mxu0 %v1297
        %1421 = vmatpush.bf16.msra.mxu0 %v1294
        %1422 = vmatpush.bf16.msra.mxu0 %v1291
        %1423 = vmatpush.bf16.msra.mxu0 %v1288
        %1424 = vmatpush.bf16.msra.mxu0 %v1285
        %1425 = vmatpush.bf16.msra.mxu0 %v1282
        %1426 = vmatpush.bf16.msra.mxu0 %v1279
        %1427 = vmatpush.bf16.msra.mxu0 %v1276
        %1428 = vmatmul.bf16.gmra.mxu0 %v929
        %v1429 = vpop.f32.mrf.mxu0
        %v1430 = vadd.f32 %v1030, %v1429
        %v1431 = vpop.f32.mrf.mxu0
        %1432 = vdwg.mxu0
        %1433 = vmatpush.bf16.msra.mxu0 %v1321
        %1434 = vmatpush.bf16.msra.mxu0 %v1318
        %1435 = vmatpush.bf16.msra.mxu0 %v1315
        %1436 = vmatpush.bf16.msra.mxu0 %v1312
        %1437 = vmatpush.bf16.msra.mxu0 %v1309
        %1438 = vmatpush.bf16.msra.mxu0 %v1306
        %1439 = vmatpush.bf16.msra.mxu0 %v1303
        %1440 = vmatpush.bf16.msra.mxu0 %v1300
        %1441 = vmatmul.bf16.gmra.mxu0 %v930
        %v1442 = vpop.f32.mrf.mxu0
        %v1443 = vadd.f32 %v1430, %v1442
        %v1444 = vpop.f32.mrf.mxu0
        %1445 = vdwg.mxu0
        %1446 = vmatpush.bf16.msra.mxu0 %v1345
        %1447 = vmatpush.bf16.msra.mxu0 %v1342
        %1448 = vmatpush.bf16.msra.mxu0 %v1339
        %1449 = vmatpush.bf16.msra.mxu0 %v1336
        %1450 = vmatpush.bf16.msra.mxu0 %v1333
        %1451 = vmatpush.bf16.msra.mxu0 %v1330
        %1452 = vmatpush.bf16.msra.mxu0 %v1327
        %1453 = vmatpush.bf16.msra.mxu0 %v1324
        %1454 = vmatmul.bf16.gmra.mxu0 %v931
        %v1455 = vpop.f32.mrf.mxu0
        %v1456 = vadd.f32 %v1443, %v1455
        %v1457 = vpop.f32.mrf.mxu0
        %1458 = vdwg.mxu0
        %1459 = vmatpush.bf16.msra.mxu0 %v1298
        %1460 = vmatpush.bf16.msra.mxu0 %v1295
        %1461 = vmatpush.bf16.msra.mxu0 %v1292
        %1462 = vmatpush.bf16.msra.mxu0 %v1289
        %1463 = vmatpush.bf16.msra.mxu0 %v1286
        %1464 = vmatpush.bf16.msra.mxu0 %v1283
        %1465 = vmatpush.bf16.msra.mxu0 %v1280
        %1466 = vmatpush.bf16.msra.mxu0 %v1277
        %1467 = vmatmul.bf16.gmra.mxu0 %v929
        %v1468 = vpop.f32.mrf.mxu0
        %v1469 = vadd.f32 %v1031, %v1468
        %v1470 = vpop.f32.mrf.mxu0
        %1471 = vdwg.mxu0
        %1472 = vmatpush.bf16.msra.mxu0 %v1322
        %1473 = vmatpush.bf16.msra.mxu0 %v1319
        %1474 = vmatpush.bf16.msra.mxu0 %v1316
        %1475 = vmatpush.bf16.msra.mxu0 %v1313
        %1476 = vmatpush.bf16.msra.mxu0 %v1310
        %1477 = vmatpush.bf16.msra.mxu0 %v1307
        %1478 = vmatpush.bf16.msra.mxu0 %v1304
        %1479 = vmatpush.bf16.msra.mxu0 %v1301
        %1480 = vmatmul.bf16.gmra.mxu0 %v930
        %v1481 = vpop.f32.mrf.mxu0
        %v1482 = vadd.f32 %v1469, %v1481
        %v1483 = vpop.f32.mrf.mxu0
        %1484 = vdwg.mxu0
        %1485 = vmatpush.bf16.msra.mxu0 %v1346
        %1486 = vmatpush.bf16.msra.mxu0 %v1343
        %1487 = vmatpush.bf16.msra.mxu0 %v1340
        %1488 = vmatpush.bf16.msra.mxu0 %v1337
        %1489 = vmatpush.bf16.msra.mxu0 %v1334
        %1490 = vmatpush.bf16.msra.mxu0 %v1331
        %1491 = vmatpush.bf16.msra.mxu0 %v1328
        %1492 = vmatpush.bf16.msra.mxu0 %v1325
        %1493 = vmatmul.bf16.gmra.mxu0 %v931
        %v1494 = vpop.f32.mrf.mxu0
        %v1495 = vadd.f32 %v1482, %v1494
        %v1496 = vpop.f32.mrf.mxu0
        %1497 = vdwg.mxu0
        %1498 = vmatpush.bf16.msra.mxu0 %v1299
        %1499 = vmatpush.bf16.msra.mxu0 %v1296
        %1500 = vmatpush.bf16.msra.mxu0 %v1293
        %1501 = vmatpush.bf16.msra.mxu0 %v1290
        %1502 = vmatpush.bf16.msra.mxu0 %v1287
        %1503 = vmatpush.bf16.msra.mxu0 %v1284
        %1504 = vmatpush.bf16.msra.mxu0 %v1281
        %1505 = vmatpush.bf16.msra.mxu0 %v1278
        %1506 = vmatmul.bf16.gmra.mxu0 %v929
        %v1507 = vpop.f32.mrf.mxu0
        %v1508 = vadd.f32 %v1032, %v1507
        %v1509 = vpop.f32.mrf.mxu0
        %1510 = vdwg.mxu0
        %1511 = vmatpush.bf16.msra.mxu0 %v1323
        %1512 = vmatpush.bf16.msra.mxu0 %v1320
        %1513 = vmatpush.bf16.msra.mxu0 %v1317
        %1514 = vmatpush.bf16.msra.mxu0 %v1314
        %1515 = vmatpush.bf16.msra.mxu0 %v1311
        %1516 = vmatpush.bf16.msra.mxu0 %v1308
        %1517 = vmatpush.bf16.msra.mxu0 %v1305
        %1518 = vmatpush.bf16.msra.mxu0 %v1302
        %1519 = vmatmul.bf16.gmra.mxu0 %v930
        %v1520 = vpop.f32.mrf.mxu0
        %v1521 = vadd.f32 %v1508, %v1520
        %v1522 = vpop.f32.mrf.mxu0
        %1523 = vdwg.mxu0
        %1524 = vmatpush.bf16.msra.mxu0 %v1347
        %1525 = vmatpush.bf16.msra.mxu0 %v1344
        %1526 = vmatpush.bf16.msra.mxu0 %v1341
        %1527 = vmatpush.bf16.msra.mxu0 %v1338
        %1528 = vmatpush.bf16.msra.mxu0 %v1335
        %1529 = vmatpush.bf16.msra.mxu0 %v1332
        %1530 = vmatpush.bf16.msra.mxu0 %v1329
        %1531 = vmatpush.bf16.msra.mxu0 %v1326
        %1532 = vmatmul.bf16.gmra.mxu0 %v931
        %v1533 = vpop.f32.mrf.mxu0
        %v1534 = vadd.f32 %v1521, %v1533
        %v1535 = vpop.f32.mrf.mxu0
        %1536 = vdwg.mxu0
        %v1537 = vmul.f32 %v1456, 0.5
        %v1538 = vmul.f32 %v1495, 0.5
        %v1539 = vmul.f32 %v1534, 0.5
        %v1540 = vmul.f32 %v1456, 0.044715
        %v1541 = vmul.f32 %v1495, 0.044715
        %v1542 = vmul.f32 %v1534, 0.044715
        %v1543 = vmul.f32 %v1540, %v1456
        %v1544 = vmul.f32 %v1541, %v1495
        %v1545 = vmul.f32 %v1542, %v1534
        %v1546 = vmul.f32 %v1543, %v1456
        %v1547 = vmul.f32 %v1544, %v1495
        %v1548 = vmul.f32 %v1545, %v1534
        %v1549 = vadd.f32 %v1456, %v1546
        %v1550 = vadd.f32 %v1495, %v1547
        %v1551 = vadd.f32 %v1534, %v1548
        %v1552 = vmul.f32 %v1549, 0.7978846
        %v1553 = vmul.f32 %v1550, 0.7978846
        %v1554 = vmul.f32 %v1551, 0.7978846
        %v1555 = vtanh.pop %v1552
        %v1556 = vtanh.pop %v1553
        %v1557 = vtanh.pop %v1554
        %v1558 = vadd.f32 %v1555, 1.0
        %v1559 = vadd.f32 %v1556, 1.0
        %v1560 = vadd.f32 %v1557, 1.0
        %v1561 = vmul.f32 %v1537, %v1558
        %v1562 = vmul.f32 %v1538, %v1559
        %v1563 = vmul.f32 %v1539, %v1560
        %1564 = vst [vmem:[%s290] sm:$0xff] %v1561
        %1565 = vst [vmem:[%s290 + $0x8] sm:$0xff] %v1562
        %1566 = vst [vmem:[%s290 + $0x10] sm:$0xff] %v1563
        %s1567 = sand.u32 %s142, 1
        %s1568 = scalar_lea.sflag [#allocation4], %s1567
        %s1569 = sand.u32 %s142, 1
        %s1570 = smul.addr %s1569, 24
        %s1571 = scalar_lea.vmem [#allocation10], %s1570
        // Predicated region
        $region57: #{tpu_custom_call.1} parent=39 // pred_check
          %p1572 = pneg %p152
        $region58: #{tpu_custom_call.1} parent=39 // pred_check_branch
          %1574 = sbr.rel (%p1572) target = $region60
        $region59: #{tpu_custom_call.1} parent=39 // pred_region
          %1576 = vsyncadd %s1568, 0
          %s1577 = smul.addr %s24, 3
          %s1578 = smul.addr %s1577, 8
          %s1579 = scalar_lea.hbm %s5, %s1578
          %s1581 = sshll.u32 %s1571, 4
          %s1582 = int_to_ptr.vmem [resolvable:$true] %s1581
          %s1583 = sshll.u32 %s1579, 4
          %s1584 = int_to_ptr.hbm [resolvable:$true] %s1583
          %1586 = dma.vmem_to_hbm [thread:$0]  %s1582, 384, %s1584, %s1568
        $region60: #{tpu_custom_call.1} parent=39 // pred_fallthru
          _
      $region40: #{tpu_custom_call.1} parent=5 // pred_fallthru
        _
      %p1587 = scmp.le.s32.totalorder 2, %s19
      // Predicated region
      $region61: #{tpu_custom_call.1} parent=5 // pred_check
        %p1588 = pneg %p1587
      $region62: #{tpu_custom_call.1} parent=5 // pred_check_branch
        %1590 = sbr.rel (%p1588) target = $region64
      $region63: #{tpu_custom_call.1} parent=5 // pred_region
        %s1591 = ssub.s32 %s19, 2
        // Predicated region
        $region65: #{tpu_custom_call.1} parent=63 // pred_check
          %p1592 = pneg %p158
        $region66: #{tpu_custom_call.1} parent=63 // pred_check_branch
          %1594 = sbr.rel (%p1592) target = $region68
        $region67: #{tpu_custom_call.1} parent=63 // pred_region
          %s1595 = sand.u32 %s143, 1
          %s1596 = scalar_lea.sflag [#allocation4], %s1595
          %s1597 = sand.u32 %s143, 1
          %s1598 = smul.addr %s1597, 24
          %s1599 = scalar_lea.vmem [#allocation10], %s1598
          %1601 = dma.done %s1596, 384
        $region68: #{tpu_custom_call.1} parent=63 // pred_fallthru
          _
      $region64: #{tpu_custom_call.1} parent=5 // pred_fallthru
        _
    $region6: #{tpu_custom_call.1} parent=1 // loop_footer
      %s23 = sadd.s32 1, %s19
    $region7: #{tpu_custom_call.1} parent=1 // loop_footer_branch
      %18 = sbr.rel target = $region3
    $region8: #{tpu_custom_call.1} parent=1 // loop_exit
      _
    %1602 = vsyncpa [#allocation3], 1
    %s1603 = scalar_lea.sflag [#allocation3], 1
    %1604 = vsyncpa %s1603, 1
    %1605 = vsyncpa [#allocation6], 1
    %1606 = vsyncpa [#allocation9], 1
    %1607 = vsyncpa [#allocation4], 1
    %s1608 = scalar_lea.sflag [#allocation4], 1
    %1609 = vsyncpa %s1608, 1

</llo_original>
